<compile_context>
chip_gen: v5e
topology: v5e:2x2
jax: 0.10.0
libtpu: 0.0.40
codegen_flags: <defaults>
</compile_context>

<pallas_src>
import math

import jax
import jax.numpy as jnp
from jax import lax
from jax.experimental import pallas as pl
from jax.experimental.pallas import tpu as pltpu


# ----------------------------- fused Pallas kernel ----------------------------- #

# (H, M, K) x (H, K, N) -> (H, M, N)   (in/out projections, PV matmul)
_PROJ_DIMS = (((2,), (1,)), ((0,), (0,)))
# (H, L, D) x (H, S, D) -> (H, L, S)   (Q K^T without an explicit transpose)
_QK_DIMS = (((2,), (2,)), ((0,), (0,)))


def _bmm(a, b, dims):
    """Leading-batch-dim batched matmul on the MXU with f32 accumulation."""
    return lax.dot_general(a, b, dims, preferred_element_type=jnp.float32)


def _fused_mhsa_kernel(q_ref, k_ref, v_ref,
                       wq_ref, bq_ref, wk_ref, bk_ref, wv_ref, bv_ref,
                       wo_ref, bo_ref, o_ref):
    """One batch element per grid step; all heads processed batched inside."""
    H = wq_ref.shape[0]
    L, E = q_ref.shape
    S = k_ref.shape[0]
    cdt = wq_ref.dtype            # MXU operand dtype (f32 here; bf16 optional)

    # Cast first (cheap at (L,E)), then broadcast over heads -> canonical
    # batched matmuls.  Broadcast is a VPU replication; no XLU transposes.
    q = jnp.broadcast_to(q_ref[...].astype(cdt)[None], (H, L, E))
    k = jnp.broadcast_to(k_ref[...].astype(cdt)[None], (H, S, E))
    v = jnp.broadcast_to(v_ref[...].astype(cdt)[None], (H, S, E))

    # In-projections, all heads at once. 1/sqrt(Dh) is pre-folded into wq/bq.
    qh = _bmm(q, wq_ref[...], _PROJ_DIMS) + bq_ref[...]      # (H, L, Dh)  f32
    kh = _bmm(k, wk_ref[...], _PROJ_DIMS) + bk_ref[...]      # (H, S, Dh)  f32
    vh = _bmm(v, wv_ref[...], _PROJ_DIMS) + bv_ref[...]      # (H, S, Dh)  f32

    # Scores for all heads: (H, L, S); K consumed directly (no .T / XLU transpose).
    s = _bmm(qh.astype(cdt), kh.astype(cdt), _QK_DIMS)

    # Softmax statistics in f32 (max-subtraction for stability).
    # TODO(synk): switch to a flash-style online softmax over S-tiles if source
    # sequences become long enough to pressure VMEM (mandatory earlier on v7x,
    # whose VMEM is 64 MiB).
    m = jnp.max(s, axis=-1, keepdims=True)
    p = jnp.exp(s - m)
    denom = jnp.sum(p, axis=-1, keepdims=True)                # (H, L, 1)

    # PV matmul first, then normalize (EUP approx reciprocal, O(L*Dh) multiplies).
    o_h = _bmm(p.astype(cdt), vh.astype(cdt), _PROJ_DIMS)     # (H, L, Dh)
    o_h = o_h * pl.reciprocal(denom, approx=True)

    # Output projection folded per head, reduced over heads (elementwise VPU
    # adds across the leading axis): (H, L, E) -> (L, E).
    o_e = _bmm(o_h.astype(cdt), wo_ref[...], _PROJ_DIMS)      # (H, L, E)
    o_ref[...] = (jnp.sum(o_e, axis=0) + bo_ref[...]).astype(o_ref.dtype)


@jax.jit
def _mhsa_forward(q, k, v, wq_h, bq_h, wk_h, bk_h, wv_h, bv_h, wo_h, bo):
    L, N, E = q.shape
    S = k.shape[0]
    H, _, Dh = wq_h.shape

    # Layout plumbing on the (tiny) raw inputs only: batch-leading layout so
    # each grid step gets a full (L, E)/(S, E) tile (last-two block dims equal
    # the full array dims, trivially satisfying the (8,128) BlockSpec rule).
    q_t = jnp.transpose(q, (1, 0, 2))   # (N, L, E)
    k_t = jnp.transpose(k, (1, 0, 2))   # (N, S, E)
    v_t = jnp.transpose(v, (1, 0, 2))   # (N, S, E)

    def full3(shape):
        # Constant block index -> Pallas keeps the block VMEM-resident
        # (no re-DMA) across the batch grid.
        return pl.BlockSpec(shape, lambda n: (0, 0, 0))

    out_t = pl.pallas_call(
        _fused_mhsa_kernel,
        out_shape=jax.ShapeDtypeStruct((N, L, E), q.dtype),
        grid=(N,),
        in_specs=[
            pl.BlockSpec((None, L, E), lambda n: (n, 0, 0)),   # q  (per batch)
            pl.BlockSpec((None, S, E), lambda n: (n, 0, 0)),   # k
            pl.BlockSpec((None, S, E), lambda n: (n, 0, 0)),   # v
            full3((H, E, Dh)), full3((H, 1, Dh)),              # wq, bq (scaled)
            full3((H, E, Dh)), full3((H, 1, Dh)),              # wk, bk
            full3((H, E, Dh)), full3((H, 1, Dh)),              # wv, bv
            full3((H, Dh, E)),                                 # w_out (per head)
            pl.BlockSpec((1, E), lambda n: (0, 0)),            # b_out
        ],
        out_specs=pl.BlockSpec((None, L, E), lambda n: (n, 0, 0)),
        compiler_params=pltpu.CompilerParams(
            dimension_semantics=("parallel",)),                # megacore / 2-TC
    )(q_t, k_t, v_t, wq_h, bq_h, wk_h, bk_h, wv_h, bv_h, wo_h, bo)

    return jnp.transpose(out_t, (1, 0, 2))   # back to (L, N, E)


# -------------------------------- module wrapper -------------------------------- #

class TemporalMHSAPallas:
    """Pallas equivalent of Temporal_MultiHeadSelfAttention (inference)."""

    def __init__(self, d_model, num_heads, dropout, key,
                 compute_dtype=jnp.float32):
        assert d_model % num_heads == 0
        self.d_model = d_model
        self.num_heads = num_heads
        self.head_dim = d_model // num_heads
        del dropout  # inference no-op (eval-mode semantics)

        E, H, Dh = d_model, num_heads, self.head_dim
        k1, k2, k3, k4 = jax.random.split(key, 4)
        # synthetic parameters, shapes match nn.MultiheadAttention
        self.in_proj_weight = 0.05 * jax.random.normal(k1, (3 * E, E), jnp.float32)
        self.in_proj_bias = 0.05 * jax.random.normal(k2, (3 * E,), jnp.float32)
        self.out_proj_weight = 0.05 * jax.random.normal(k3, (E, E), jnp.float32)
        self.out_proj_bias = 0.05 * jax.random.normal(k4, (E,), jnp.float32)

        # ---- one-time host-side weight re-arrangement into per-head layouts ----
        scale = 1.0 / math.sqrt(Dh)
        wq, wk, wv = (self.in_proj_weight[:E],
                      self.in_proj_weight[E:2 * E],
                      self.in_proj_weight[2 * E:])
        bq, bk, bv = (self.in_proj_bias[:E],
                      self.in_proj_bias[E:2 * E],
                      self.in_proj_bias[2 * E:])

        def per_head_in(w):            # (E, E) -> (H, E, Dh)
            return jnp.transpose(w.reshape(H, Dh, E), (0, 2, 1))

        # compute_dtype=bf16 is recommended for the MXU on v6e/v7x; f32 default
        # keeps the tolerance against the f32 reference tight.
        self.wq_h = (per_head_in(wq) * scale).astype(compute_dtype)
        self.wk_h = per_head_in(wk).astype(compute_dtype)
        self.wv_h = per_head_in(wv).astype(compute_dtype)
        self.bq_h = (bq.reshape(H, 1, Dh) * scale).astype(jnp.float32)
        self.bk_h = bk.reshape(H, 1, Dh).astype(jnp.float32)
        self.bv_h = bv.reshape(H, 1, Dh).astype(jnp.float32)
        self.wo_h = jnp.transpose(self.out_proj_weight).reshape(H, Dh, E).astype(compute_dtype)
        self.bo = self.out_proj_bias.reshape(1, E).astype(jnp.float32)

    def __call__(self, q, k, v):
        # q: (L, N, E), k/v: (S, N, E) -> (L, N, E)
        return _mhsa_forward(q, k, v,
                             self.wq_h, self.bq_h, self.wk_h, self.bk_h,
                             self.wv_h, self.bv_h, self.wo_h, self.bo)


# --------------------------- pure-JAX reference check --------------------------- #

def _reference(q, k, v, mod: TemporalMHSAPallas):
    L, N, E = q.shape
    S = k.shape[0]
    H, Dh = mod.num_heads, mod.head_dim
    wq, wk, wv = (mod.in_proj_weight[:E], mod.in_proj_weight[E:2 * E],
                  mod.in_proj_weight[2 * E:])
    bq, bk, bv = (mod.in_proj_bias[:E], mod.in_proj_bias[E:2 * E],
                  mod.in_proj_bias[2 * E:])
    qp = q.reshape(L * N, E) @ wq.T + bq
    kp = k.reshape(S * N, E) @ wk.T + bk
    vp = v.reshape(S * N, E) @ wv.T + bv
    qh = qp.reshape(L, N * H, Dh).transpose(1, 0, 2)
    kh = kp.reshape(S, N * H, Dh).transpose(1, 0, 2)
    vh = vp.reshape(S, N * H, Dh).transpose(1, 0, 2)
    s = jnp.einsum("bld,bsd->bls", qh, kh) / math.sqrt(Dh)
    p = jax.nn.softmax(s, axis=-1)
    o = jnp.einsum("bls,bsd->bld", p, vh)
    o = o.transpose(1, 0, 2).reshape(L * N, E)
    o = o @ mod.out_proj_weight.T + mod.out_proj_bias
    return o.reshape(L, N, E)


if __name__ == "__main__":
    d_model, num_heads, dropout = 32, 4, 0.1
    L, S, N = 8, 8, 2   # target seq, source seq, batch

    key = jax.random.PRNGKey(0)
    k_params, k_q, k_k, k_v = jax.random.split(key, 4)

    mod = TemporalMHSAPallas(d_model, num_heads, dropout, k_params)

    q = jax.random.normal(k_q, (L, N, d_model), jnp.float32)
    k = jax.random.normal(k_k, (S, N, d_model), jnp.float32)
    v = jax.random.normal(k_v, (S, N, d_model), jnp.float32)

    out = mod(q, k, v)
    out = jax.block_until_ready(out)

    ref = _reference(q, k, v, mod)
    assert out.shape == (L, N, d_model)
    # approx reciprocal (EUP) -> slightly looser tolerance than pure-f32
    assert jnp.allclose(out, ref, atol=2e-3, rtol=2e-3), "mismatch vs reference"

    print("KERNEL_OK")
</pallas_src>

<mosaic_0001>
module attributes {stable_mosaic.version = 11 : i64} {
  func.func @_fused_mhsa_kernel(%arg0: i32, %arg1: memref<1x8x32xf32, #tpu.memory_space<vmem>>, %arg2: memref<1x8x32xf32, #tpu.memory_space<vmem>>, %arg3: memref<1x8x32xf32, #tpu.memory_space<vmem>>, %arg4: memref<4x32x8xf32, #tpu.memory_space<vmem>>, %arg5: memref<4x1x8xf32, #tpu.memory_space<vmem>>, %arg6: memref<4x32x8xf32, #tpu.memory_space<vmem>>, %arg7: memref<4x1x8xf32, #tpu.memory_space<vmem>>, %arg8: memref<4x32x8xf32, #tpu.memory_space<vmem>>, %arg9: memref<4x1x8xf32, #tpu.memory_space<vmem>>, %arg10: memref<4x8x32xf32, #tpu.memory_space<vmem>>, %arg11: memref<1x32xf32, #tpu.memory_space<vmem>>, %arg12: memref<1x8x32xf32, #tpu.memory_space<vmem>>) attributes {dimension_semantics = [#tpu.dimension_semantics<parallel>], iteration_bounds = array<i64: 2>, scalar_prefetch = 0 : i64, scratch_operands = 0 : i64, tpu.core_type = #tpu.core_type<tc>, window_params = [{transform_indices = @transform_0, window_bounds = array<i64: 1, 8, 32>}, {transform_indices = @transform_1, window_bounds = array<i64: 1, 8, 32>}, {transform_indices = @transform_2, window_bounds = array<i64: 1, 8, 32>}, {pipeline_mode = #tpu.pipeline_mode<synchronous>, transform_indices = @transform_3, window_bounds = array<i64: 4, 32, 8>}, {pipeline_mode = #tpu.pipeline_mode<synchronous>, transform_indices = @transform_4, window_bounds = array<i64: 4, 1, 8>}, {pipeline_mode = #tpu.pipeline_mode<synchronous>, transform_indices = @transform_5, window_bounds = array<i64: 4, 32, 8>}, {pipeline_mode = #tpu.pipeline_mode<synchronous>, transform_indices = @transform_6, window_bounds = array<i64: 4, 1, 8>}, {pipeline_mode = #tpu.pipeline_mode<synchronous>, transform_indices = @transform_7, window_bounds = array<i64: 4, 32, 8>}, {pipeline_mode = #tpu.pipeline_mode<synchronous>, transform_indices = @transform_8, window_bounds = array<i64: 4, 1, 8>}, {pipeline_mode = #tpu.pipeline_mode<synchronous>, transform_indices = @transform_9, window_bounds = array<i64: 4, 8, 32>}, {pipeline_mode = #tpu.pipeline_mode<synchronous>, transform_indices = @transform_10, window_bounds = array<i64: 1, 32>}, {transform_indices = @transform_11, window_bounds = array<i64: 1, 8, 32>}]} {
    %c0 = arith.constant 0 : index
    %c0_0 = arith.constant 0 : index
    %c0_1 = arith.constant 0 : index
    %0 = vector.load %arg1[%c0, %c0_0, %c0_1] : memref<1x8x32xf32, #tpu.memory_space<vmem>>, vector<1x8x32xf32>
    %1 = vector.shape_cast %0 : vector<1x8x32xf32> to vector<8x32xf32>
    %2 = vector.shape_cast %1 : vector<8x32xf32> to vector<1x8x32xf32>
    %3 = vector.shape_cast %2 : vector<1x8x32xf32> to vector<1x8x32xf32>
    %4 = vector.broadcast %3 : vector<1x8x32xf32> to vector<4x8x32xf32>
    %c0_2 = arith.constant 0 : index
    %c0_3 = arith.constant 0 : index
    %c0_4 = arith.constant 0 : index
    %5 = vector.load %arg2[%c0_2, %c0_3, %c0_4] : memref<1x8x32xf32, #tpu.memory_space<vmem>>, vector<1x8x32xf32>
    %6 = vector.shape_cast %5 : vector<1x8x32xf32> to vector<8x32xf32>
    %7 = vector.shape_cast %6 : vector<8x32xf32> to vector<1x8x32xf32>
    %8 = vector.shape_cast %7 : vector<1x8x32xf32> to vector<1x8x32xf32>
    %9 = vector.broadcast %8 : vector<1x8x32xf32> to vector<4x8x32xf32>
    %c0_5 = arith.constant 0 : index
    %c0_6 = arith.constant 0 : index
    %c0_7 = arith.constant 0 : index
    %10 = vector.load %arg3[%c0_5, %c0_6, %c0_7] : memref<1x8x32xf32, #tpu.memory_space<vmem>>, vector<1x8x32xf32>
    %11 = vector.shape_cast %10 : vector<1x8x32xf32> to vector<8x32xf32>
    %12 = vector.shape_cast %11 : vector<8x32xf32> to vector<1x8x32xf32>
    %13 = vector.shape_cast %12 : vector<1x8x32xf32> to vector<1x8x32xf32>
    %14 = vector.broadcast %13 : vector<1x8x32xf32> to vector<4x8x32xf32>
    %c0_8 = arith.constant 0 : index
    %c0_9 = arith.constant 0 : index
    %c0_10 = arith.constant 0 : index
    %15 = vector.load %arg4[%c0_8, %c0_9, %c0_10] : memref<4x32x8xf32, #tpu.memory_space<vmem>>, vector<4x32x8xf32>
    %cst = arith.constant dense<0.000000e+00> : vector<4x8x8xf32>
    %16 = tpu.matmul %4, %15, %cst {dimension_numbers = #tpu.dot_dimension_numbers<[2], [1], [1], [2], [0, 0, 0, 1, 1, 2], [0], [0]>} : vector<4x8x32xf32>, vector<4x32x8xf32>, vector<4x8x8xf32> -> vector<4x8x8xf32>
    %c0_11 = arith.constant 0 : index
    %c0_12 = arith.constant 0 : index
    %c0_13 = arith.constant 0 : index
    %17 = vector.load %arg5[%c0_11, %c0_12, %c0_13] : memref<4x1x8xf32, #tpu.memory_space<vmem>>, vector<4x1x8xf32>
    %18 = vector.broadcast %17 : vector<4x1x8xf32> to vector<4x8x8xf32>
    %19 = arith.addf %16, %18 : vector<4x8x8xf32>
    %c0_14 = arith.constant 0 : index
    %c0_15 = arith.constant 0 : index
    %c0_16 = arith.constant 0 : index
    %20 = vector.load %arg6[%c0_14, %c0_15, %c0_16] : memref<4x32x8xf32, #tpu.memory_space<vmem>>, vector<4x32x8xf32>
    %cst_17 = arith.constant dense<0.000000e+00> : vector<4x8x8xf32>
    %21 = tpu.matmul %9, %20, %cst_17 {dimension_numbers = #tpu.dot_dimension_numbers<[2], [1], [1], [2], [0, 0, 0, 1, 1, 2], [0], [0]>} : vector<4x8x32xf32>, vector<4x32x8xf32>, vector<4x8x8xf32> -> vector<4x8x8xf32>
    %c0_18 = arith.constant 0 : index
    %c0_19 = arith.constant 0 : index
    %c0_20 = arith.constant 0 : index
    %22 = vector.load %arg7[%c0_18, %c0_19, %c0_20] : memref<4x1x8xf32, #tpu.memory_space<vmem>>, vector<4x1x8xf32>
    %23 = vector.broadcast %22 : vector<4x1x8xf32> to vector<4x8x8xf32>
    %24 = arith.addf %21, %23 : vector<4x8x8xf32>
    %c0_21 = arith.constant 0 : index
    %c0_22 = arith.constant 0 : index
    %c0_23 = arith.constant 0 : index
    %25 = vector.load %arg8[%c0_21, %c0_22, %c0_23] : memref<4x32x8xf32, #tpu.memory_space<vmem>>, vector<4x32x8xf32>
    %cst_24 = arith.constant dense<0.000000e+00> : vector<4x8x8xf32>
    %26 = tpu.matmul %14, %25, %cst_24 {dimension_numbers = #tpu.dot_dimension_numbers<[2], [1], [1], [2], [0, 0, 0, 1, 1, 2], [0], [0]>} : vector<4x8x32xf32>, vector<4x32x8xf32>, vector<4x8x8xf32> -> vector<4x8x8xf32>
    %c0_25 = arith.constant 0 : index
    %c0_26 = arith.constant 0 : index
    %c0_27 = arith.constant 0 : index
    %27 = vector.load %arg9[%c0_25, %c0_26, %c0_27] : memref<4x1x8xf32, #tpu.memory_space<vmem>>, vector<4x1x8xf32>
    %28 = vector.broadcast %27 : vector<4x1x8xf32> to vector<4x8x8xf32>
    %29 = arith.addf %26, %28 : vector<4x8x8xf32>
    %cst_28 = arith.constant dense<0.000000e+00> : vector<4x8x8xf32>
    %30 = tpu.matmul %19, %24, %cst_28 {dimension_numbers = #tpu.dot_dimension_numbers<[2], [2], [1], [1], [0, 0, 0, 1, 1, 1], [0], [0]>} : vector<4x8x8xf32>, vector<4x8x8xf32>, vector<4x8x8xf32> -> vector<4x8x8xf32>
    %cst_29 = arith.constant dense<0xFF800000> : vector<4x8xf32>
    %31 = vector.multi_reduction <maximumf>, %30, %cst_29 [2] : vector<4x8x8xf32> to vector<4x8xf32>
    %32 = vector.shape_cast %31 : vector<4x8xf32> to vector<4x8x1xf32>
    %33 = vector.broadcast %32 : vector<4x8x1xf32> to vector<4x8x8xf32>
    %34 = arith.subf %30, %33 : vector<4x8x8xf32>
    %35 = math.exp %34 : vector<4x8x8xf32>
    %cst_30 = arith.constant dense<0.000000e+00> : vector<4x8xf32>
    %36 = vector.multi_reduction <add>, %35, %cst_30 [2] : vector<4x8x8xf32> to vector<4x8xf32>
    %37 = vector.shape_cast %36 : vector<4x8xf32> to vector<4x8x1xf32>
    %cst_31 = arith.constant dense<0.000000e+00> : vector<4x8x8xf32>
    %38 = tpu.matmul %35, %29, %cst_31 {dimension_numbers = #tpu.dot_dimension_numbers<[2], [1], [1], [2], [0, 0, 0, 1, 1, 2], [0], [0]>} : vector<4x8x8xf32>, vector<4x8x8xf32>, vector<4x8x8xf32> -> vector<4x8x8xf32>
    %39 = tpu.reciprocal %37 {approx = true} : vector<4x8x1xf32> -> vector<4x8x1xf32>
    %40 = vector.broadcast %39 : vector<4x8x1xf32> to vector<4x8x8xf32>
    %41 = arith.mulf %38, %40 : vector<4x8x8xf32>
    %c0_32 = arith.constant 0 : index
    %c0_33 = arith.constant 0 : index
    %c0_34 = arith.constant 0 : index
    %42 = vector.load %arg10[%c0_32, %c0_33, %c0_34] : memref<4x8x32xf32, #tpu.memory_space<vmem>>, vector<4x8x32xf32>
    %cst_35 = arith.constant dense<0.000000e+00> : vector<4x8x32xf32>
    %43 = tpu.matmul %41, %42, %cst_35 {dimension_numbers = #tpu.dot_dimension_numbers<[2], [1], [1], [2], [0, 0, 0, 1, 1, 2], [0], [0]>} : vector<4x8x8xf32>, vector<4x8x32xf32>, vector<4x8x32xf32> -> vector<4x8x32xf32>
    %cst_36 = arith.constant dense<0.000000e+00> : vector<8x32xf32>
    %44 = vector.multi_reduction <add>, %43, %cst_36 [0] : vector<4x8x32xf32> to vector<8x32xf32>
    %c0_37 = arith.constant 0 : index
    %c0_38 = arith.constant 0 : index
    %45 = vector.load %arg11[%c0_37, %c0_38] : memref<1x32xf32, #tpu.memory_space<vmem>>, vector<1x32xf32>
    %46 = vector.broadcast %45 : vector<1x32xf32> to vector<8x32xf32>
    %47 = arith.addf %44, %46 : vector<8x32xf32>
    %c0_39 = arith.constant 0 : index
    %c0_40 = arith.constant 0 : index
    %c0_41 = arith.constant 0 : index
    %48 = vector.load %arg12[%c0_39, %c0_40, %c0_41] : memref<1x8x32xf32, #tpu.memory_space<vmem>>, vector<1x8x32xf32>
    %49 = vector.shape_cast %48 : vector<1x8x32xf32> to vector<8x32xf32>
    %50 = vector.shape_cast %47 : vector<8x32xf32> to vector<1x8x32xf32>
    tpu.vector_store %arg12[%c0_39, %c0_40, %c0_41], %50 {strides = array<i32>} : memref<1x8x32xf32, #tpu.memory_space<vmem>>, vector<1x8x32xf32>,
    return
  }
  func.func @transform_0(%arg0: i32) -> (i32, i32, i32) {
    %c0_i32 = arith.constant 0 : i32
    %c0_i32_0 = arith.constant 0 : i32
    %c0_i32_1 = arith.constant 0 : i32
    return %arg0, %c0_i32, %c0_i32_0 : i32, i32, i32
  }
  func.func @transform_1(%arg0: i32) -> (i32, i32, i32) {
    %c0_i32 = arith.constant 0 : i32
    %c0_i32_0 = arith.constant 0 : i32
    %c0_i32_1 = arith.constant 0 : i32
    return %arg0, %c0_i32, %c0_i32_0 : i32, i32, i32
  }
  func.func @transform_2(%arg0: i32) -> (i32, i32, i32) {
    %c0_i32 = arith.constant 0 : i32
    %c0_i32_0 = arith.constant 0 : i32
    %c0_i32_1 = arith.constant 0 : i32
    return %arg0, %c0_i32, %c0_i32_0 : i32, i32, i32
  }
  func.func @transform_3(%arg0: i32) -> (i32, i32, i32) {
    %c0_i32 = arith.constant 0 : i32
    %c0_i32_0 = arith.constant 0 : i32
    %c0_i32_1 = arith.constant 0 : i32
    %c0_i32_2 = arith.constant 0 : i32
    return %c0_i32, %c0_i32_0, %c0_i32_1 : i32, i32, i32
  }
  func.func @transform_4(%arg0: i32) -> (i32, i32, i32) {
    %c0_i32 = arith.constant 0 : i32
    %c0_i32_0 = arith.constant 0 : i32
    %c0_i32_1 = arith.constant 0 : i32
    %c0_i32_2 = arith.constant 0 : i32
    return %c0_i32, %c0_i32_0, %c0_i32_1 : i32, i32, i32
  }
  func.func @transform_5(%arg0: i32) -> (i32, i32, i32) {
    %c0_i32 = arith.constant 0 : i32
    %c0_i32_0 = arith.constant 0 : i32
    %c0_i32_1 = arith.constant 0 : i32
    %c0_i32_2 = arith.constant 0 : i32
    return %c0_i32, %c0_i32_0, %c0_i32_1 : i32, i32, i32
  }
  func.func @transform_6(%arg0: i32) -> (i32, i32, i32) {
    %c0_i32 = arith.constant 0 : i32
    %c0_i32_0 = arith.constant 0 : i32
    %c0_i32_1 = arith.constant 0 : i32
    %c0_i32_2 = arith.constant 0 : i32
    return %c0_i32, %c0_i32_0, %c0_i32_1 : i32, i32, i32
  }
  func.func @transform_7(%arg0: i32) -> (i32, i32, i32) {
    %c0_i32 = arith.constant 0 : i32
    %c0_i32_0 = arith.constant 0 : i32
    %c0_i32_1 = arith.constant 0 : i32
    %c0_i32_2 = arith.constant 0 : i32
    return %c0_i32, %c0_i32_0, %c0_i32_1 : i32, i32, i32
  }
  func.func @transform_8(%arg0: i32) -> (i32, i32, i32) {
    %c0_i32 = arith.constant 0 : i32
    %c0_i32_0 = arith.constant 0 : i32
    %c0_i32_1 = arith.constant 0 : i32
    %c0_i32_2 = arith.constant 0 : i32
    return %c0_i32, %c0_i32_0, %c0_i32_1 : i32, i32, i32
  }
  func.func @transform_9(%arg0: i32) -> (i32, i32, i32) {
    %c0_i32 = arith.constant 0 : i32
    %c0_i32_0 = arith.constant 0 : i32
    %c0_i32_1 = arith.constant 0 : i32
    %c0_i32_2 = arith.constant 0 : i32
    return %c0_i32, %c0_i32_0, %c0_i32_1 : i32, i32, i32
  }
  func.func @transform_10(%arg0: i32) -> (i32, i32) {
    %c0_i32 = arith.constant 0 : i32
    %c0_i32_0 = arith.constant 0 : i32
    %c0_i32_1 = arith.constant 0 : i32
    return %c0_i32, %c0_i32_0 : i32, i32
  }
  func.func @transform_11(%arg0: i32) -> (i32, i32, i32) {
    %c0_i32 = arith.constant 0 : i32
    %c0_i32_0 = arith.constant 0 : i32
    %c0_i32_1 = arith.constant 0 : i32
    return %arg0, %c0_i32, %c0_i32_0 : i32, i32, i32
  }
}

</mosaic_0001>

<llo_original>
// kernel: _mhsa_forward.1
$region0: #{_mhsa_forward.1}
  #allocation0 [shape = 'u32[]', space=smem, size = 0x4, offset = 0x4, fixed_abs, tag = 'smem constant byte address 0x4 - core index']
  #allocation1 [shape = 'u32[72,128]{1,0:T(1,128)}', space=vmem, size = 0x9000, scoped, tag = 'internal scratch']
  %s0 = inlined_call_operand.vmem [shape: f32[2,8,32], index: 0, kind: input, shape index: {}]
  %s1 = inlined_call_operand.vmem [shape: f32[2,8,32], index: 1, kind: input, shape index: {}]
  %s2 = inlined_call_operand.vmem [shape: f32[2,8,32], index: 2, kind: input, shape index: {}]
  %s3 = inlined_call_operand.vmem [shape: f32[4,32,8], index: 3, kind: input, shape index: {}]
  %s4 = inlined_call_operand.vmem [shape: f32[4,1,8], index: 4, kind: input, shape index: {}]
  %s5 = inlined_call_operand.vmem [shape: f32[4,32,8], index: 5, kind: input, shape index: {}]
  %s6 = inlined_call_operand.vmem [shape: f32[4,1,8], index: 6, kind: input, shape index: {}]
  %s7 = inlined_call_operand.vmem [shape: f32[4,32,8], index: 7, kind: input, shape index: {}]
  %s8 = inlined_call_operand.vmem [shape: f32[4,1,8], index: 8, kind: input, shape index: {}]
  %s9 = inlined_call_operand.vmem [shape: f32[4,8,32], index: 9, kind: input, shape index: {}]
  %s10 = inlined_call_operand.vmem [shape: f32[1,32], index: 10, kind: input, shape index: {}]
  %s11 = inlined_call_operand.vmem [shape: f32[2,8,32], index: 11, kind: output, shape index: {}]
  %s12 = sld [smem:[#allocation0]]
  $region77: #{_mhsa_forward.1} parent=0
    _
  %s14 = ssub.s32 1, %s12
  %s15 = scalar_select 0, %s14, %s12
  loop: start=0, step=1, limit=4
  $region2: #{_mhsa_forward.1} parent=0 // loop_pre_header
    _
  $region3: #{_mhsa_forward.1} parent=0 // loop_header
    %s17 = sphi 0, %s21
    %p18 = scmp.ge.s32.totalorder %s17, 4
    %s27 = sphi 0, %s29
    %s30 = sphi 0, %s27
    %s31 = sphi 0, %s30
    %s47 = sphi 0, %s31
    %s53 = sphi 0, %s55
    %s56 = sphi 0, %s53
    %s57 = sphi 0, %s56
    %s73 = sphi 0, %s57
    %s79 = sphi 0, %s81
    %s82 = sphi 0, %s79
    %s83 = sphi 0, %s82
    %s99 = sphi 0, %s83
    %s103 = sphi 0, %s103
    %s105 = sphi 0, %s103
    %s106 = sphi 0, %s105
    %s120 = sphi 0, %s106
    %s124 = sphi 0, %s124
    %s126 = sphi 0, %s124
    %s127 = sphi 0, %s126
    %s141 = sphi 0, %s127
    %s145 = sphi 0, %s145
    %s147 = sphi 0, %s145
    %s148 = sphi 0, %s147
    %s162 = sphi 0, %s148
    %s166 = sphi 0, %s166
    %s168 = sphi 0, %s166
    %s169 = sphi 0, %s168
    %s183 = sphi 0, %s169
    %s187 = sphi 0, %s187
    %s189 = sphi 0, %s187
    %s190 = sphi 0, %s189
    %s204 = sphi 0, %s190
    %s208 = sphi 0, %s208
    %s210 = sphi 0, %s208
    %s211 = sphi 0, %s210
    %s225 = sphi 0, %s211
    %s229 = sphi 0, %s229
    %s231 = sphi 0, %s229
    %s232 = sphi 0, %s231
    %s246 = sphi 0, %s232
    %s250 = sphi 0, %s250
    %s252 = sphi 0, %s250
    %s253 = sphi 0, %s252
    %s267 = sphi 0, %s253
    %s273 = sphi 0, %s275
    %s276 = sphi 0, %s273
    %s277 = sphi 0, %s276
    %s293 = sphi 0, %s277
  $region4: #{_mhsa_forward.1} parent=0 // loop_header_branch
    %20 = sbr.rel (%p18) target = $region8
  $region5: #{_mhsa_forward.1} parent=0 // loop_body
    %s22 = ssub.s32 %s17, 1
    %s23 = ssub.s32 %s17, 2
    %s24 = sadd.s32 %s17, 1
    %s25 = ssub.s32 %s17, %s24
    %p26 = scmp.eq.s32.totalorder %s25, 0
    %s28 = sadd.s32 %s27, 1
    %s29 = scalar_select %p26, %s27, %s28
    %p32 = pneg %p26
    %p33 = scmp.eq.s32.totalorder %s17, 1
    %p34 = por %p32, %p33
    %p35 = scmp.ne.s32.totalorder %s27, %s30
    %p36 = scmp.eq.s32.totalorder %s17, 0
    %p37 = por %p35, %p36
    %p38 = scmp.ne.s32.totalorder %s27, %s30
    %p39 = scmp.eq.s32.totalorder %s22, 1
    %p40 = por %p38, %p39
    %p41 = scmp.ne.s32.totalorder %s30, %s31
    %p42 = scmp.eq.s32.totalorder %s22, 0
    %p43 = por %p41, %p42
    %p44 = scmp.ne.s32.totalorder %s30, %s31
    %p45 = scmp.eq.s32.totalorder %s23, 1
    %p46 = por %p44, %p45
    %p48 = scmp.ne.s32.totalorder %s31, %s47
    %p49 = scmp.eq.s32.totalorder %s23, 0
    %p50 = por %p48, %p49
    %s51 = ssub.s32 %s17, %s24
    %p52 = scmp.eq.s32.totalorder %s51, 0
    %s54 = sadd.s32 %s53, 1
    %s55 = scalar_select %p52, %s53, %s54
    %p58 = pneg %p52
    %p59 = scmp.eq.s32.totalorder %s17, 1
    %p60 = por %p58, %p59
    %p61 = scmp.ne.s32.totalorder %s53, %s56
    %p62 = scmp.eq.s32.totalorder %s17, 0
    %p63 = por %p61, %p62
    %p64 = scmp.ne.s32.totalorder %s53, %s56
    %p65 = scmp.eq.s32.totalorder %s22, 1
    %p66 = por %p64, %p65
    %p67 = scmp.ne.s32.totalorder %s56, %s57
    %p68 = scmp.eq.s32.totalorder %s22, 0
    %p69 = por %p67, %p68
    %p70 = scmp.ne.s32.totalorder %s56, %s57
    %p71 = scmp.eq.s32.totalorder %s23, 1
    %p72 = por %p70, %p71
    %p74 = scmp.ne.s32.totalorder %s57, %s73
    %p75 = scmp.eq.s32.totalorder %s23, 0
    %p76 = por %p74, %p75
    %s77 = ssub.s32 %s17, %s24
    %p78 = scmp.eq.s32.totalorder %s77, 0
    %s80 = sadd.s32 %s79, 1
    %s81 = scalar_select %p78, %s79, %s80
    %p84 = pneg %p78
    %p85 = scmp.eq.s32.totalorder %s17, 1
    %p86 = por %p84, %p85
    %p87 = scmp.ne.s32.totalorder %s79, %s82
    %p88 = scmp.eq.s32.totalorder %s17, 0
    %p89 = por %p87, %p88
    %p90 = scmp.ne.s32.totalorder %s79, %s82
    %p91 = scmp.eq.s32.totalorder %s22, 1
    %p92 = por %p90, %p91
    %p93 = scmp.ne.s32.totalorder %s82, %s83
    %p94 = scmp.eq.s32.totalorder %s22, 0
    %p95 = por %p93, %p94
    %p96 = scmp.ne.s32.totalorder %s82, %s83
    %p97 = scmp.eq.s32.totalorder %s23, 1
    %p98 = por %p96, %p97
    %p100 = scmp.ne.s32.totalorder %s83, %s99
    %p101 = scmp.eq.s32.totalorder %s23, 0
    %p102 = por %p100, %p101
    %s104 = sadd.s32 %s103, 1
    %p107 = scmp.eq.s32.totalorder %s17, 1
    %p108 = scmp.ne.s32.totalorder %s103, %s105
    %p109 = scmp.eq.s32.totalorder %s17, 0
    %p110 = por %p108, %p109
    %p111 = scmp.ne.s32.totalorder %s103, %s105
    %p112 = scmp.eq.s32.totalorder %s22, 1
    %p113 = por %p111, %p112
    %p114 = scmp.ne.s32.totalorder %s105, %s106
    %p115 = scmp.eq.s32.totalorder %s22, 0
    %p116 = por %p114, %p115
    %p117 = scmp.ne.s32.totalorder %s105, %s106
    %p118 = scmp.eq.s32.totalorder %s23, 1
    %p119 = por %p117, %p118
    %p121 = scmp.ne.s32.totalorder %s106, %s120
    %p122 = scmp.eq.s32.totalorder %s23, 0
    %p123 = por %p121, %p122
    %s125 = sadd.s32 %s124, 1
    %p128 = scmp.eq.s32.totalorder %s17, 1
    %p129 = scmp.ne.s32.totalorder %s124, %s126
    %p130 = scmp.eq.s32.totalorder %s17, 0
    %p131 = por %p129, %p130
    %p132 = scmp.ne.s32.totalorder %s124, %s126
    %p133 = scmp.eq.s32.totalorder %s22, 1
    %p134 = por %p132, %p133
    %p135 = scmp.ne.s32.totalorder %s126, %s127
    %p136 = scmp.eq.s32.totalorder %s22, 0
    %p137 = por %p135, %p136
    %p138 = scmp.ne.s32.totalorder %s126, %s127
    %p139 = scmp.eq.s32.totalorder %s23, 1
    %p140 = por %p138, %p139
    %p142 = scmp.ne.s32.totalorder %s127, %s141
    %p143 = scmp.eq.s32.totalorder %s23, 0
    %p144 = por %p142, %p143
    %s146 = sadd.s32 %s145, 1
    %p149 = scmp.eq.s32.totalorder %s17, 1
    %p150 = scmp.ne.s32.totalorder %s145, %s147
    %p151 = scmp.eq.s32.totalorder %s17, 0
    %p152 = por %p150, %p151
    %p153 = scmp.ne.s32.totalorder %s145, %s147
    %p154 = scmp.eq.s32.totalorder %s22, 1
    %p155 = por %p153, %p154
    %p156 = scmp.ne.s32.totalorder %s147, %s148
    %p157 = scmp.eq.s32.totalorder %s22, 0
    %p158 = por %p156, %p157
    %p159 = scmp.ne.s32.totalorder %s147, %s148
    %p160 = scmp.eq.s32.totalorder %s23, 1
    %p161 = por %p159, %p160
    %p163 = scmp.ne.s32.totalorder %s148, %s162
    %p164 = scmp.eq.s32.totalorder %s23, 0
    %p165 = por %p163, %p164
    %s167 = sadd.s32 %s166, 1
    %p170 = scmp.eq.s32.totalorder %s17, 1
    %p171 = scmp.ne.s32.totalorder %s166, %s168
    %p172 = scmp.eq.s32.totalorder %s17, 0
    %p173 = por %p171, %p172
    %p174 = scmp.ne.s32.totalorder %s166, %s168
    %p175 = scmp.eq.s32.totalorder %s22, 1
    %p176 = por %p174, %p175
    %p177 = scmp.ne.s32.totalorder %s168, %s169
    %p178 = scmp.eq.s32.totalorder %s22, 0
    %p179 = por %p177, %p178
    %p180 = scmp.ne.s32.totalorder %s168, %s169
    %p181 = scmp.eq.s32.totalorder %s23, 1
    %p182 = por %p180, %p181
    %p184 = scmp.ne.s32.totalorder %s169, %s183
    %p185 = scmp.eq.s32.totalorder %s23, 0
    %p186 = por %p184, %p185
    %s188 = sadd.s32 %s187, 1
    %p191 = scmp.eq.s32.totalorder %s17, 1
    %p192 = scmp.ne.s32.totalorder %s187, %s189
    %p193 = scmp.eq.s32.totalorder %s17, 0
    %p194 = por %p192, %p193
    %p195 = scmp.ne.s32.totalorder %s187, %s189
    %p196 = scmp.eq.s32.totalorder %s22, 1
    %p197 = por %p195, %p196
    %p198 = scmp.ne.s32.totalorder %s189, %s190
    %p199 = scmp.eq.s32.totalorder %s22, 0
    %p200 = por %p198, %p199
    %p201 = scmp.ne.s32.totalorder %s189, %s190
    %p202 = scmp.eq.s32.totalorder %s23, 1
    %p203 = por %p201, %p202
    %p205 = scmp.ne.s32.totalorder %s190, %s204
    %p206 = scmp.eq.s32.totalorder %s23, 0
    %p207 = por %p205, %p206
    %s209 = sadd.s32 %s208, 1
    %p212 = scmp.eq.s32.totalorder %s17, 1
    %p213 = scmp.ne.s32.totalorder %s208, %s210
    %p214 = scmp.eq.s32.totalorder %s17, 0
    %p215 = por %p213, %p214
    %p216 = scmp.ne.s32.totalorder %s208, %s210
    %p217 = scmp.eq.s32.totalorder %s22, 1
    %p218 = por %p216, %p217
    %p219 = scmp.ne.s32.totalorder %s210, %s211
    %p220 = scmp.eq.s32.totalorder %s22, 0
    %p221 = por %p219, %p220
    %p222 = scmp.ne.s32.totalorder %s210, %s211
    %p223 = scmp.eq.s32.totalorder %s23, 1
    %p224 = por %p222, %p223
    %p226 = scmp.ne.s32.totalorder %s211, %s225
    %p227 = scmp.eq.s32.totalorder %s23, 0
    %p228 = por %p226, %p227
    %s230 = sadd.s32 %s229, 1
    %p233 = scmp.eq.s32.totalorder %s17, 1
    %p234 = scmp.ne.s32.totalorder %s229, %s231
    %p235 = scmp.eq.s32.totalorder %s17, 0
    %p236 = por %p234, %p235
    %p237 = scmp.ne.s32.totalorder %s229, %s231
    %p238 = scmp.eq.s32.totalorder %s22, 1
    %p239 = por %p237, %p238
    %p240 = scmp.ne.s32.totalorder %s231, %s232
    %p241 = scmp.eq.s32.totalorder %s22, 0
    %p242 = por %p240, %p241
    %p243 = scmp.ne.s32.totalorder %s231, %s232
    %p244 = scmp.eq.s32.totalorder %s23, 1
    %p245 = por %p243, %p244
    %p247 = scmp.ne.s32.totalorder %s232, %s246
    %p248 = scmp.eq.s32.totalorder %s23, 0
    %p249 = por %p247, %p248
    %s251 = sadd.s32 %s250, 1
    %p254 = scmp.eq.s32.totalorder %s17, 1
    %p255 = scmp.ne.s32.totalorder %s250, %s252
    %p256 = scmp.eq.s32.totalorder %s17, 0
    %p257 = por %p255, %p256
    %p258 = scmp.ne.s32.totalorder %s250, %s252
    %p259 = scmp.eq.s32.totalorder %s22, 1
    %p260 = por %p258, %p259
    %p261 = scmp.ne.s32.totalorder %s252, %s253
    %p262 = scmp.eq.s32.totalorder %s22, 0
    %p263 = por %p261, %p262
    %p264 = scmp.ne.s32.totalorder %s252, %s253
    %p265 = scmp.eq.s32.totalorder %s23, 1
    %p266 = por %p264, %p265
    %p268 = scmp.ne.s32.totalorder %s253, %s267
    %p269 = scmp.eq.s32.totalorder %s23, 0
    %p270 = por %p268, %p269
    %s271 = ssub.s32 %s17, %s24
    %p272 = scmp.eq.s32.totalorder %s271, 0
    %s274 = sadd.s32 %s273, 1
    %s275 = scalar_select %p272, %s273, %s274
    %p278 = pneg %p272
    %p279 = scmp.eq.s32.totalorder %s17, 1
    %p280 = por %p278, %p279
    %p281 = scmp.ne.s32.totalorder %s273, %s276
    %p282 = scmp.eq.s32.totalorder %s17, 0
    %p283 = por %p281, %p282
    %p284 = scmp.ne.s32.totalorder %s273, %s276
    %p285 = scmp.eq.s32.totalorder %s22, 1
    %p286 = por %p284, %p285
    %p287 = scmp.ne.s32.totalorder %s276, %s277
    %p288 = scmp.eq.s32.totalorder %s22, 0
    %p289 = por %p287, %p288
    %p290 = scmp.ne.s32.totalorder %s276, %s277
    %p291 = scmp.eq.s32.totalorder %s23, 1
    %p292 = por %p290, %p291
    %p294 = scmp.ne.s32.totalorder %s277, %s293
    %p295 = scmp.eq.s32.totalorder %s23, 0
    %p296 = por %p294, %p295
    %p297 = scmp.le.s32.totalorder 1, %s17
    %p298 = scmp.lt.s32.totalorder %s17, 3
    %p299 = pnand %p297, %p298
    %p300 = pneg %p299
    // Predicated region
    $region9: #{_mhsa_forward.1} parent=5 // pred_check
      _
    $region10: #{_mhsa_forward.1} parent=5 // pred_check_branch
      %302 = sbr.rel (%p299) target = $region12
    $region11: #{_mhsa_forward.1} parent=5 // pred_region
      %s303 = ssub.s32 %s17, 1
      // Predicated region
      $region13: #{_mhsa_forward.1} parent=11 // pred_check
        %p304 = pneg %p116
      $region14: #{_mhsa_forward.1} parent=11 // pred_check_branch
        %306 = sbr.rel (%p304) target = $region16
      $region15: #{_mhsa_forward.1} parent=11 // pred_region
        _
      $region16: #{_mhsa_forward.1} parent=11 // pred_fallthru
        _
      // Predicated region
      $region17: #{_mhsa_forward.1} parent=11 // pred_check
        %p307 = pneg %p137
      $region18: #{_mhsa_forward.1} parent=11 // pred_check_branch
        %309 = sbr.rel (%p307) target = $region20
      $region19: #{_mhsa_forward.1} parent=11 // pred_region
        _
      $region20: #{_mhsa_forward.1} parent=11 // pred_fallthru
        _
      // Predicated region
      $region21: #{_mhsa_forward.1} parent=11 // pred_check
        %p310 = pneg %p158
      $region22: #{_mhsa_forward.1} parent=11 // pred_check_branch
        %312 = sbr.rel (%p310) target = $region24
      $region23: #{_mhsa_forward.1} parent=11 // pred_region
        _
      $region24: #{_mhsa_forward.1} parent=11 // pred_fallthru
        _
      // Predicated region
      $region25: #{_mhsa_forward.1} parent=11 // pred_check
        %p313 = pneg %p179
      $region26: #{_mhsa_forward.1} parent=11 // pred_check_branch
        %315 = sbr.rel (%p313) target = $region28
      $region27: #{_mhsa_forward.1} parent=11 // pred_region
        _
      $region28: #{_mhsa_forward.1} parent=11 // pred_fallthru
        _
      // Predicated region
      $region29: #{_mhsa_forward.1} parent=11 // pred_check
        %p316 = pneg %p200
      $region30: #{_mhsa_forward.1} parent=11 // pred_check_branch
        %318 = sbr.rel (%p316) target = $region32
      $region31: #{_mhsa_forward.1} parent=11 // pred_region
        _
      $region32: #{_mhsa_forward.1} parent=11 // pred_fallthru
        _
      // Predicated region
      $region33: #{_mhsa_forward.1} parent=11 // pred_check
        %p319 = pneg %p221
      $region34: #{_mhsa_forward.1} parent=11 // pred_check_branch
        %321 = sbr.rel (%p319) target = $region36
      $region35: #{_mhsa_forward.1} parent=11 // pred_region
        _
      $region36: #{_mhsa_forward.1} parent=11 // pred_fallthru
        _
      // Predicated region
      $region37: #{_mhsa_forward.1} parent=11 // pred_check
        %p322 = pneg %p242
      $region38: #{_mhsa_forward.1} parent=11 // pred_check_branch
        %324 = sbr.rel (%p322) target = $region40
      $region39: #{_mhsa_forward.1} parent=11 // pred_region
        _
      $region40: #{_mhsa_forward.1} parent=11 // pred_fallthru
        _
      // Predicated region
      $region41: #{_mhsa_forward.1} parent=11 // pred_check
        %p325 = pneg %p263
      $region42: #{_mhsa_forward.1} parent=11 // pred_check_branch
        %327 = sbr.rel (%p325) target = $region44
      $region43: #{_mhsa_forward.1} parent=11 // pred_region
        _
      $region44: #{_mhsa_forward.1} parent=11 // pred_fallthru
        _
    $region12: #{_mhsa_forward.1} parent=5 // pred_fallthru
      _
    %p328 = scmp.lt.s32.totalorder %s17, 2
    // Predicated region
    $region45: #{_mhsa_forward.1} parent=5 // pred_check
      %p329 = pneg %p328
    $region46: #{_mhsa_forward.1} parent=5 // pred_check_branch
      %331 = sbr.rel (%p329) target = $region48
    $region47: #{_mhsa_forward.1} parent=5 // pred_region
      // Predicated region
      $region49: #{_mhsa_forward.1} parent=47 // pred_check
        %p332 = pneg %p37
      $region50: #{_mhsa_forward.1} parent=47 // pred_check_branch
        %334 = sbr.rel (%p332) target = $region52
      $region51: #{_mhsa_forward.1} parent=47 // pred_region
        %p335 = scmp.lt.s32.totalorder %s17, 1
        %s336 = scalar_select %p335, %s17, 1
        %s337 = smul.addr %s336, 8
        %s338 = scalar_lea.vmem %s0, %s337
      $region52: #{_mhsa_forward.1} parent=47 // pred_fallthru
        _
      // Predicated region
      $region53: #{_mhsa_forward.1} parent=47 // pred_check
        %p339 = pneg %p63
      $region54: #{_mhsa_forward.1} parent=47 // pred_check_branch
        %341 = sbr.rel (%p339) target = $region56
      $region55: #{_mhsa_forward.1} parent=47 // pred_region
        %p342 = scmp.lt.s32.totalorder %s17, 1
        %s343 = scalar_select %p342, %s17, 1
        %s344 = smul.addr %s343, 8
        %s345 = scalar_lea.vmem %s1, %s344
      $region56: #{_mhsa_forward.1} parent=47 // pred_fallthru
        _
      // Predicated region
      $region57: #{_mhsa_forward.1} parent=47 // pred_check
        %p346 = pneg %p89
      $region58: #{_mhsa_forward.1} parent=47 // pred_check_branch
        %348 = sbr.rel (%p346) target = $region60
      $region59: #{_mhsa_forward.1} parent=47 // pred_region
        %p349 = scmp.lt.s32.totalorder %s17, 1
        %s350 = scalar_select %p349, %s17, 1
        %s351 = smul.addr %s350, 8
        %s352 = scalar_lea.vmem %s2, %s351
      $region60: #{_mhsa_forward.1} parent=47 // pred_fallthru
        _
    $region48: #{_mhsa_forward.1} parent=5 // pred_fallthru
      _
    %p353 = scmp.le.s32.totalorder 1, %s17
    %p354 = scmp.lt.s32.totalorder %s17, 3
    %p355 = pnand %p353, %p354
    %p356 = pneg %p355
    // Predicated region
    $region61: #{_mhsa_forward.1} parent=5 // pred_check
      _
    $region62: #{_mhsa_forward.1} parent=5 // pred_check_branch
      %358 = sbr.rel (%p355) target = $region64
    $region63: #{_mhsa_forward.1} parent=5 // pred_region
      %s359 = ssub.s32 %s17, 1
      %p360 = scmp.lt.s32.totalorder %s22, 1
      %s361 = scalar_select %p360, %s22, 1
      %s362 = smul.addr %s361, 8
      %s363 = scalar_lea.vmem %s0, %s362
      %p364 = pneg %p43
      %p365 = pneg %p40
      %p366 = scmp.lt.s32.totalorder %s22, 1
      %s367 = scalar_select %p366, %s22, 1
      %s368 = smul.addr %s367, 8
      %s369 = scalar_lea.vmem %s1, %s368
      %p370 = pneg %p69
      %p371 = pneg %p66
      %p372 = scmp.lt.s32.totalorder %s22, 1
      %s373 = scalar_select %p372, %s22, 1
      %s374 = smul.addr %s373, 8
      %s375 = scalar_lea.vmem %s2, %s374
      %p376 = pneg %p95
      %p377 = pneg %p92
      %p378 = pneg %p116
      %p379 = pneg %p113
      %p380 = pneg %p137
      %p381 = pneg %p134
      %p382 = pneg %p158
      %p383 = pneg %p155
      %p384 = pneg %p179
      %p385 = pneg %p176
      %p386 = pneg %p200
      %p387 = pneg %p197
      %p388 = pneg %p221
      %p389 = pneg %p218
      %p390 = pneg %p242
      %p391 = pneg %p239
      %p392 = pneg %p263
      %p393 = pneg %p260
      %p394 = pneg %p289
      %p395 = pneg %p286
      %p396 = scmp.lt.s32.totalorder %s22, 1
      %s397 = scalar_select %p396, %s22, 1
      %s398 = smul.addr %s397, 8
      %s399 = scalar_lea.vmem %s11, %s398
      %p400 = scmp.lt.s32.totalorder %s22, 1
      %s401 = scalar_select %p400, %s22, 1
      %s402 = smul.addr %s401, 8
      %s403 = scalar_lea.vmem %s0, %s402
      %p404 = scmp.lt.s32.totalorder %s22, 1
      %s405 = scalar_select %p404, %s22, 1
      %s406 = smul.addr %s405, 8
      %s407 = scalar_lea.vmem %s1, %s406
      %p408 = scmp.lt.s32.totalorder %s22, 1
      %s409 = scalar_select %p408, %s22, 1
      %s410 = smul.addr %s409, 8
      %s411 = scalar_lea.vmem %s2, %s410
      %p412 = scmp.lt.s32.totalorder %s22, 1
      %s413 = scalar_select %p412, %s22, 1
      %s414 = smul.addr %s413, 8
      %s415 = scalar_lea.vmem %s11, %s414
      %v416 = vld [vmem:[%s403] sm:$0xff]
      %v417 = vld [vmem:[%s407] sm:$0xff]
      %v418 = vld [vmem:[%s411] sm:$0xff]
      %v419 = vld [vmem:[%s3] sm:$0xff]
      %v420 = vld [vmem:[%s3 + $0x8] sm:$0xff]
      %v421 = vld [vmem:[%s3 + $0x10] sm:$0xff]
      %v422 = vld [vmem:[%s3 + $0x18] sm:$0xff]
      %v423 = vld [vmem:[%s3 + $0x20] sm:$0xff]
      %v424 = vld [vmem:[%s3 + $0x28] sm:$0xff]
      %v425 = vld [vmem:[%s3 + $0x30] sm:$0xff]
      %v426 = vld [vmem:[%s3 + $0x38] sm:$0xff]
      %v427 = vld [vmem:[%s3 + $0x40] sm:$0xff]
      %v428 = vld [vmem:[%s3 + $0x48] sm:$0xff]
      %v429 = vld [vmem:[%s3 + $0x50] sm:$0xff]
      %v430 = vld [vmem:[%s3 + $0x58] sm:$0xff]
      %v431 = vld [vmem:[%s3 + $0x60] sm:$0xff]
      %v432 = vld [vmem:[%s3 + $0x68] sm:$0xff]
      %v433 = vld [vmem:[%s3 + $0x70] sm:$0xff]
      %v434 = vld [vmem:[%s3 + $0x78] sm:$0xff]
      %v435 = vld [vmem:[%s4] sm:$0x1]
      %v436 = vld [vmem:[%s4 + $0x1] sm:$0x1]
      %v437 = vld [vmem:[%s4 + $0x2] sm:$0x1]
      %v438 = vld [vmem:[%s4 + $0x3] sm:$0x1]
      %v443 = vperm.slane %v435, 0
      %v444 = vperm.slane %v436, 0
      %v445 = vperm.slane %v437, 0
      %v446 = vperm.slane %v438, 0
      %vm451 = vcmask 261120
      %v453 = vsel %vm451, %v416, 0
      %455 = vmatpush.msra.mxu0 0.0
      %456 = vmatpush.msra.mxu0 0.0
      %457 = vmatpush.msra.mxu0 0.0
      %458 = vmatpush.msra.mxu0 0.0
      %459 = vmatpush.msra.mxu0 0.0
      %460 = vmatpush.msra.mxu0 0.0
      %461 = vmatpush.msra.mxu0 0.0
      %462 = vmatpush.msra.mxu0 0.0
      %463 = vmatpush.msra.mxu0 0.0
      %464 = vmatpush.msra.mxu0 0.0
      %465 = vmatpush.msra.mxu0 0.0
      %466 = vmatpush.msra.mxu0 0.0
      %467 = vmatpush.msra.mxu0 %v422
      %468 = vmatpush.msra.mxu0 %v421
      %469 = vmatpush.msra.mxu0 %v420
      %470 = vmatpush.msra.mxu0 %v419
      %471 = vmatmul.f32.gmra.mxu0 %v453
      %v472 = vpop.f32.mrf.mxu0
      %v473 = vadd.f32 %v443, %v472
      %474 = vdwg.mxu0
      %475 = vmatpush.msra.mxu0 0.0
      %476 = vmatpush.msra.mxu0 0.0
      %477 = vmatpush.msra.mxu0 0.0
      %478 = vmatpush.msra.mxu0 0.0
      %479 = vmatpush.msra.mxu0 0.0
      %480 = vmatpush.msra.mxu0 0.0
      %481 = vmatpush.msra.mxu0 0.0
      %482 = vmatpush.msra.mxu0 0.0
      %483 = vmatpush.msra.mxu0 0.0
      %484 = vmatpush.msra.mxu0 0.0
      %485 = vmatpush.msra.mxu0 0.0
      %486 = vmatpush.msra.mxu0 0.0
      %487 = vmatpush.msra.mxu0 %v426
      %488 = vmatpush.msra.mxu0 %v425
      %489 = vmatpush.msra.mxu0 %v424
      %490 = vmatpush.msra.mxu0 %v423
      %491 = vmatmul.f32.gmra.mxu0 %v453
      %v492 = vpop.f32.mrf.mxu0
      %v493 = vadd.f32 %v444, %v492
      %494 = vdwg.mxu0
      %495 = vmatpush.msra.mxu0 0.0
      %496 = vmatpush.msra.mxu0 0.0
      %497 = vmatpush.msra.mxu0 0.0
      %498 = vmatpush.msra.mxu0 0.0
      %499 = vmatpush.msra.mxu0 0.0
      %500 = vmatpush.msra.mxu0 0.0
      %501 = vmatpush.msra.mxu0 0.0
      %502 = vmatpush.msra.mxu0 0.0
      %503 = vmatpush.msra.mxu0 0.0
      %504 = vmatpush.msra.mxu0 0.0
      %505 = vmatpush.msra.mxu0 0.0
      %506 = vmatpush.msra.mxu0 0.0
      %507 = vmatpush.msra.mxu0 %v430
      %508 = vmatpush.msra.mxu0 %v429
      %509 = vmatpush.msra.mxu0 %v428
      %510 = vmatpush.msra.mxu0 %v427
      %511 = vmatmul.f32.gmra.mxu0 %v453
      %v512 = vpop.f32.mrf.mxu0
      %v513 = vadd.f32 %v445, %v512
      %514 = vdwg.mxu0
      %515 = vmatpush.msra.mxu0 0.0
      %516 = vmatpush.msra.mxu0 0.0
      %517 = vmatpush.msra.mxu0 0.0
      %518 = vmatpush.msra.mxu0 0.0
      %519 = vmatpush.msra.mxu0 0.0
      %520 = vmatpush.msra.mxu0 0.0
      %521 = vmatpush.msra.mxu0 0.0
      %522 = vmatpush.msra.mxu0 0.0
      %523 = vmatpush.msra.mxu0 0.0
      %524 = vmatpush.msra.mxu0 0.0
      %525 = vmatpush.msra.mxu0 0.0
      %526 = vmatpush.msra.mxu0 0.0
      %527 = vmatpush.msra.mxu0 %v434
      %528 = vmatpush.msra.mxu0 %v433
      %529 = vmatpush.msra.mxu0 %v432
      %530 = vmatpush.msra.mxu0 %v431
      %531 = vmatmul.f32.gmra.mxu0 %v453
      %v532 = vpop.f32.mrf.mxu0
      %v533 = vadd.f32 %v446, %v532
      %534 = vdwg.mxu0
      %v535 = vld [vmem:[%s5] sm:$0xff]
      %v536 = vld [vmem:[%s5 + $0x8] sm:$0xff]
      %v537 = vld [vmem:[%s5 + $0x10] sm:$0xff]
      %v538 = vld [vmem:[%s5 + $0x18] sm:$0xff]
      %v539 = vld [vmem:[%s5 + $0x20] sm:$0xff]
      %v540 = vld [vmem:[%s5 + $0x28] sm:$0xff]
      %v541 = vld [vmem:[%s5 + $0x30] sm:$0xff]
      %v542 = vld [vmem:[%s5 + $0x38] sm:$0xff]
      %v543 = vld [vmem:[%s5 + $0x40] sm:$0xff]
      %v544 = vld [vmem:[%s5 + $0x48] sm:$0xff]
      %v545 = vld [vmem:[%s5 + $0x50] sm:$0xff]
      %v546 = vld [vmem:[%s5 + $0x58] sm:$0xff]
      %v547 = vld [vmem:[%s5 + $0x60] sm:$0xff]
      %v548 = vld [vmem:[%s5 + $0x68] sm:$0xff]
      %v549 = vld [vmem:[%s5 + $0x70] sm:$0xff]
      %v550 = vld [vmem:[%s5 + $0x78] sm:$0xff]
      %v551 = vld [vmem:[%s6] sm:$0x1]
      %v552 = vld [vmem:[%s6 + $0x1] sm:$0x1]
      %v553 = vld [vmem:[%s6 + $0x2] sm:$0x1]
      %v554 = vld [vmem:[%s6 + $0x3] sm:$0x1]
      %v559 = vperm.slane %v551, 0
      %v560 = vperm.slane %v552, 0
      %v561 = vperm.slane %v553, 0
      %v562 = vperm.slane %v554, 0
      %v568 = vsel %vm451, %v417, 0
      %570 = vmatpush.msra.mxu0 0.0
      %571 = vmatpush.msra.mxu0 0.0
      %572 = vmatpush.msra.mxu0 0.0
      %573 = vmatpush.msra.mxu0 0.0
      %574 = vmatpush.msra.mxu0 0.0
      %575 = vmatpush.msra.mxu0 0.0
      %576 = vmatpush.msra.mxu0 0.0
      %577 = vmatpush.msra.mxu0 0.0
      %578 = vmatpush.msra.mxu0 0.0
      %579 = vmatpush.msra.mxu0 0.0
      %580 = vmatpush.msra.mxu0 0.0
      %581 = vmatpush.msra.mxu0 0.0
      %582 = vmatpush.msra.mxu0 %v538
      %583 = vmatpush.msra.mxu0 %v537
      %584 = vmatpush.msra.mxu0 %v536
      %585 = vmatpush.msra.mxu0 %v535
      %586 = vmatmul.f32.gmra.mxu0 %v568
      %v587 = vpop.f32.mrf.mxu0
      %v588 = vadd.f32 %v559, %v587
      %589 = vdwg.mxu0
      %590 = vmatpush.msra.mxu0 0.0
      %591 = vmatpush.msra.mxu0 0.0
      %592 = vmatpush.msra.mxu0 0.0
      %593 = vmatpush.msra.mxu0 0.0
      %594 = vmatpush.msra.mxu0 0.0
      %595 = vmatpush.msra.mxu0 0.0
      %596 = vmatpush.msra.mxu0 0.0
      %597 = vmatpush.msra.mxu0 0.0
      %598 = vmatpush.msra.mxu0 0.0
      %599 = vmatpush.msra.mxu0 0.0
      %600 = vmatpush.msra.mxu0 0.0
      %601 = vmatpush.msra.mxu0 0.0
      %602 = vmatpush.msra.mxu0 %v542
      %603 = vmatpush.msra.mxu0 %v541
      %604 = vmatpush.msra.mxu0 %v540
      %605 = vmatpush.msra.mxu0 %v539
      %606 = vmatmul.f32.gmra.mxu0 %v568
      %v607 = vpop.f32.mrf.mxu0
      %v608 = vadd.f32 %v560, %v607
      %609 = vdwg.mxu0
      %610 = vmatpush.msra.mxu0 0.0
      %611 = vmatpush.msra.mxu0 0.0
      %612 = vmatpush.msra.mxu0 0.0
      %613 = vmatpush.msra.mxu0 0.0
      %614 = vmatpush.msra.mxu0 0.0
      %615 = vmatpush.msra.mxu0 0.0
      %616 = vmatpush.msra.mxu0 0.0
      %617 = vmatpush.msra.mxu0 0.0
      %618 = vmatpush.msra.mxu0 0.0
      %619 = vmatpush.msra.mxu0 0.0
      %620 = vmatpush.msra.mxu0 0.0
      %621 = vmatpush.msra.mxu0 0.0
      %622 = vmatpush.msra.mxu0 %v546
      %623 = vmatpush.msra.mxu0 %v545
      %624 = vmatpush.msra.mxu0 %v544
      %625 = vmatpush.msra.mxu0 %v543
      %626 = vmatmul.f32.gmra.mxu0 %v568
      %v627 = vpop.f32.mrf.mxu0
      %v628 = vadd.f32 %v561, %v627
      %629 = vdwg.mxu0
      %630 = vmatpush.msra.mxu0 0.0
      %631 = vmatpush.msra.mxu0 0.0
      %632 = vmatpush.msra.mxu0 0.0
      %633 = vmatpush.msra.mxu0 0.0
      %634 = vmatpush.msra.mxu0 0.0
      %635 = vmatpush.msra.mxu0 0.0
      %636 = vmatpush.msra.mxu0 0.0
      %637 = vmatpush.msra.mxu0 0.0
      %638 = vmatpush.msra.mxu0 0.0
      %639 = vmatpush.msra.mxu0 0.0
      %640 = vmatpush.msra.mxu0 0.0
      %641 = vmatpush.msra.mxu0 0.0
      %642 = vmatpush.msra.mxu0 %v550
      %643 = vmatpush.msra.mxu0 %v549
      %644 = vmatpush.msra.mxu0 %v548
      %645 = vmatpush.msra.mxu0 %v547
      %646 = vmatmul.f32.gmra.mxu0 %v568
      %v647 = vpop.f32.mrf.mxu0
      %v648 = vadd.f32 %v562, %v647
      %649 = vdwg.mxu0
      %v650 = vld [vmem:[%s7] sm:$0xff]
      %v651 = vld [vmem:[%s7 + $0x8] sm:$0xff]
      %v652 = vld [vmem:[%s7 + $0x10] sm:$0xff]
      %v653 = vld [vmem:[%s7 + $0x18] sm:$0xff]
      %v654 = vld [vmem:[%s7 + $0x20] sm:$0xff]
      %v655 = vld [vmem:[%s7 + $0x28] sm:$0xff]
      %v656 = vld [vmem:[%s7 + $0x30] sm:$0xff]
      %v657 = vld [vmem:[%s7 + $0x38] sm:$0xff]
      %v658 = vld [vmem:[%s7 + $0x40] sm:$0xff]
      %v659 = vld [vmem:[%s7 + $0x48] sm:$0xff]
      %v660 = vld [vmem:[%s7 + $0x50] sm:$0xff]
      %v661 = vld [vmem:[%s7 + $0x58] sm:$0xff]
      %v662 = vld [vmem:[%s7 + $0x60] sm:$0xff]
      %v663 = vld [vmem:[%s7 + $0x68] sm:$0xff]
      %v664 = vld [vmem:[%s7 + $0x70] sm:$0xff]
      %v665 = vld [vmem:[%s7 + $0x78] sm:$0xff]
      %v666 = vld [vmem:[%s8] sm:$0x1]
      %v667 = vld [vmem:[%s8 + $0x1] sm:$0x1]
      %v668 = vld [vmem:[%s8 + $0x2] sm:$0x1]
      %v669 = vld [vmem:[%s8 + $0x3] sm:$0x1]
      %v674 = vperm.slane %v666, 0
      %v675 = vperm.slane %v667, 0
      %v676 = vperm.slane %v668, 0
      %v677 = vperm.slane %v669, 0
      %v683 = vsel %vm451, %v418, 0
      %685 = vmatpush.msra.mxu0 0.0
      %686 = vmatpush.msra.mxu0 0.0
      %687 = vmatpush.msra.mxu0 0.0
      %688 = vmatpush.msra.mxu0 0.0
      %689 = vmatpush.msra.mxu0 0.0
      %690 = vmatpush.msra.mxu0 0.0
      %691 = vmatpush.msra.mxu0 0.0
      %692 = vmatpush.msra.mxu0 0.0
      %693 = vmatpush.msra.mxu0 0.0
      %694 = vmatpush.msra.mxu0 0.0
      %695 = vmatpush.msra.mxu0 0.0
      %696 = vmatpush.msra.mxu0 0.0
      %697 = vmatpush.msra.mxu0 %v653
      %698 = vmatpush.msra.mxu0 %v652
      %699 = vmatpush.msra.mxu0 %v651
      %700 = vmatpush.msra.mxu0 %v650
      %701 = vmatmul.f32.gmra.mxu0 %v683
      %v702 = vpop.f32.mrf.mxu0
      %v703 = vadd.f32 %v674, %v702
      %704 = vdwg.mxu0
      %705 = vmatpush.msra.mxu0 0.0
      %706 = vmatpush.msra.mxu0 0.0
      %707 = vmatpush.msra.mxu0 0.0
      %708 = vmatpush.msra.mxu0 0.0
      %709 = vmatpush.msra.mxu0 0.0
      %710 = vmatpush.msra.mxu0 0.0
      %711 = vmatpush.msra.mxu0 0.0
      %712 = vmatpush.msra.mxu0 0.0
      %713 = vmatpush.msra.mxu0 0.0
      %714 = vmatpush.msra.mxu0 0.0
      %715 = vmatpush.msra.mxu0 0.0
      %716 = vmatpush.msra.mxu0 0.0
      %717 = vmatpush.msra.mxu0 %v657
      %718 = vmatpush.msra.mxu0 %v656
      %719 = vmatpush.msra.mxu0 %v655
      %720 = vmatpush.msra.mxu0 %v654
      %721 = vmatmul.f32.gmra.mxu0 %v683
      %v722 = vpop.f32.mrf.mxu0
      %v723 = vadd.f32 %v675, %v722
      %724 = vdwg.mxu0
      %725 = vmatpush.msra.mxu0 0.0
      %726 = vmatpush.msra.mxu0 0.0
      %727 = vmatpush.msra.mxu0 0.0
      %728 = vmatpush.msra.mxu0 0.0
      %729 = vmatpush.msra.mxu0 0.0
      %730 = vmatpush.msra.mxu0 0.0
      %731 = vmatpush.msra.mxu0 0.0
      %732 = vmatpush.msra.mxu0 0.0
      %733 = vmatpush.msra.mxu0 0.0
      %734 = vmatpush.msra.mxu0 0.0
      %735 = vmatpush.msra.mxu0 0.0
      %736 = vmatpush.msra.mxu0 0.0
      %737 = vmatpush.msra.mxu0 %v661
      %738 = vmatpush.msra.mxu0 %v660
      %739 = vmatpush.msra.mxu0 %v659
      %740 = vmatpush.msra.mxu0 %v658
      %741 = vmatmul.f32.gmra.mxu0 %v683
      %v742 = vpop.f32.mrf.mxu0
      %v743 = vadd.f32 %v676, %v742
      %744 = vdwg.mxu0
      %745 = vmatpush.msra.mxu0 0.0
      %746 = vmatpush.msra.mxu0 0.0
      %747 = vmatpush.msra.mxu0 0.0
      %748 = vmatpush.msra.mxu0 0.0
      %749 = vmatpush.msra.mxu0 0.0
      %750 = vmatpush.msra.mxu0 0.0
      %751 = vmatpush.msra.mxu0 0.0
      %752 = vmatpush.msra.mxu0 0.0
      %753 = vmatpush.msra.mxu0 0.0
      %754 = vmatpush.msra.mxu0 0.0
      %755 = vmatpush.msra.mxu0 0.0
      %756 = vmatpush.msra.mxu0 0.0
      %757 = vmatpush.msra.mxu0 %v665
      %758 = vmatpush.msra.mxu0 %v664
      %759 = vmatpush.msra.mxu0 %v663
      %760 = vmatpush.msra.mxu0 %v662
      %761 = vmatmul.f32.gmra.mxu0 %v683
      %v762 = vpop.f32.mrf.mxu0
      %v763 = vadd.f32 %v677, %v762
      %764 = vdwg.mxu0
      %vm765 = vcmask 64512
      %v767 = vsel %vm765, %v473, 0
      %v770 = vsel %vm765, %v588, 0
      %772 = vmatpush.xpose.msra.mxu0 0.0
      %773 = vmatpush.xpose.msra.mxu0 0.0
      %774 = vmatpush.xpose.msra.mxu0 0.0
      %775 = vmatpush.xpose.msra.mxu0 0.0
      %776 = vmatpush.xpose.msra.mxu0 0.0
      %777 = vmatpush.xpose.msra.mxu0 0.0
      %778 = vmatpush.xpose.msra.mxu0 0.0
      %779 = vmatpush.xpose.msra.mxu0 0.0
      %780 = vmatpush.xpose.msra.mxu0 0.0
      %781 = vmatpush.xpose.msra.mxu0 0.0
      %782 = vmatpush.xpose.msra.mxu0 0.0
      %783 = vmatpush.xpose.msra.mxu0 0.0
      %784 = vmatpush.xpose.msra.mxu0 0.0
      %785 = vmatpush.xpose.msra.mxu0 0.0
      %786 = vmatpush.xpose.msra.mxu0 0.0
      %787 = vmatpush.xpose.msra.mxu0 %v770
      %788 = vmatmul.f32.gmra.mxu0 %v767
      %v789 = vpop.f32.mrf.mxu0
      %v790 = vadd.f32 0.0, %v789
      %791 = vdwg.mxu0
      %v793 = vsel %vm765, %v493, 0
      %v796 = vsel %vm765, %v608, 0
      %798 = vmatpush.xpose.msra.mxu0 0.0
      %799 = vmatpush.xpose.msra.mxu0 0.0
      %800 = vmatpush.xpose.msra.mxu0 0.0
      %801 = vmatpush.xpose.msra.mxu0 0.0
      %802 = vmatpush.xpose.msra.mxu0 0.0
      %803 = vmatpush.xpose.msra.mxu0 0.0
      %804 = vmatpush.xpose.msra.mxu0 0.0
      %805 = vmatpush.xpose.msra.mxu0 0.0
      %806 = vmatpush.xpose.msra.mxu0 0.0
      %807 = vmatpush.xpose.msra.mxu0 0.0
      %808 = vmatpush.xpose.msra.mxu0 0.0
      %809 = vmatpush.xpose.msra.mxu0 0.0
      %810 = vmatpush.xpose.msra.mxu0 0.0
      %811 = vmatpush.xpose.msra.mxu0 0.0
      %812 = vmatpush.xpose.msra.mxu0 0.0
      %813 = vmatpush.xpose.msra.mxu0 %v796
      %814 = vmatmul.f32.gmra.mxu0 %v793
      %v815 = vpop.f32.mrf.mxu0
      %v816 = vadd.f32 0.0, %v815
      %817 = vdwg.mxu0
      %v819 = vsel %vm765, %v513, 0
      %v822 = vsel %vm765, %v628, 0
      %824 = vmatpush.xpose.msra.mxu0 0.0
      %825 = vmatpush.xpose.msra.mxu0 0.0
      %826 = vmatpush.xpose.msra.mxu0 0.0
      %827 = vmatpush.xpose.msra.mxu0 0.0
      %828 = vmatpush.xpose.msra.mxu0 0.0
      %829 = vmatpush.xpose.msra.mxu0 0.0
      %830 = vmatpush.xpose.msra.mxu0 0.0
      %831 = vmatpush.xpose.msra.mxu0 0.0
      %832 = vmatpush.xpose.msra.mxu0 0.0
      %833 = vmatpush.xpose.msra.mxu0 0.0
      %834 = vmatpush.xpose.msra.mxu0 0.0
      %835 = vmatpush.xpose.msra.mxu0 0.0
      %836 = vmatpush.xpose.msra.mxu0 0.0
      %837 = vmatpush.xpose.msra.mxu0 0.0
      %838 = vmatpush.xpose.msra.mxu0 0.0
      %839 = vmatpush.xpose.msra.mxu0 %v822
      %840 = vmatmul.f32.gmra.mxu0 %v819
      %v841 = vpop.f32.mrf.mxu0
      %v842 = vadd.f32 0.0, %v841
      %843 = vdwg.mxu0
      %v845 = vsel %vm765, %v533, 0
      %v848 = vsel %vm765, %v648, 0
      %850 = vmatpush.xpose.msra.mxu0 0.0
      %851 = vmatpush.xpose.msra.mxu0 0.0
      %852 = vmatpush.xpose.msra.mxu0 0.0
      %853 = vmatpush.xpose.msra.mxu0 0.0
      %854 = vmatpush.xpose.msra.mxu0 0.0
      %855 = vmatpush.xpose.msra.mxu0 0.0
      %856 = vmatpush.xpose.msra.mxu0 0.0
      %857 = vmatpush.xpose.msra.mxu0 0.0
      %858 = vmatpush.xpose.msra.mxu0 0.0
      %859 = vmatpush.xpose.msra.mxu0 0.0
      %860 = vmatpush.xpose.msra.mxu0 0.0
      %861 = vmatpush.xpose.msra.mxu0 0.0
      %862 = vmatpush.xpose.msra.mxu0 0.0
      %863 = vmatpush.xpose.msra.mxu0 0.0
      %864 = vmatpush.xpose.msra.mxu0 0.0
      %865 = vmatpush.xpose.msra.mxu0 %v848
      %866 = vmatmul.f32.gmra.mxu0 %v845
      %v867 = vpop.f32.mrf.mxu0
      %v868 = vadd.f32 0.0, %v867
      %869 = vdwg.mxu0
      %v870 = vsel %vm765, %v790, -inf
      %871 = vmax.xlane.f32.xlu0 %v870
      %v872 = vpop.xlane.xlu0 %871
      %v873 = vsel %vm765, %v816, -inf
      %874 = vmax.xlane.f32.xlu0 %v873
      %v875 = vpop.xlane.xlu0 %874
      %v876 = vsel %vm765, %v842, -inf
      %877 = vmax.xlane.f32.xlu0 %v876
      %v878 = vpop.xlane.xlu0 %877
      %v879 = vsel %vm765, %v868, -inf
      %880 = vmax.xlane.f32.xlu0 %v879
      %v881 = vpop.xlane.xlu0 %880
      %v882 = vsub.f32 %v790, %v872
      %v883 = vsub.f32 %v816, %v875
      %v884 = vsub.f32 %v842, %v878
      %v885 = vsub.f32 %v868, %v881
      %v886 = vmul.f32 %v882, 1.442695
      %v887 = vpow.pop %v886
      %v888 = vmul.f32 %v883, 1.442695
      %v889 = vpow.pop %v888
      %v890 = vmul.f32 %v884, 1.442695
      %v891 = vpow.pop %v890
      %v892 = vmul.f32 %v885, 1.442695
      %v893 = vpow.pop %v892
      %v894 = vsel %vm765, %v887, 0.0
      %895 = vadd.xlane.f32.xlu0 %v894
      %v896 = vpop.xlane.xlu0 %895
      %v897 = vsel %vm765, %v889, 0.0
      %898 = vadd.xlane.f32.xlu0 %v897
      %v899 = vpop.xlane.xlu0 %898
      %v900 = vsel %vm765, %v891, 0.0
      %901 = vadd.xlane.f32.xlu0 %v900
      %v902 = vpop.xlane.xlu0 %901
      %v903 = vsel %vm765, %v893, 0.0
      %904 = vadd.xlane.f32.xlu0 %v903
      %v905 = vpop.xlane.xlu0 %904
      %v907 = vsel %vm765, %v887, 0
      %909 = vmatpush.msra.mxu0 0.0
      %910 = vmatpush.msra.mxu0 0.0
      %911 = vmatpush.msra.mxu0 0.0
      %912 = vmatpush.msra.mxu0 0.0
      %913 = vmatpush.msra.mxu0 0.0
      %914 = vmatpush.msra.mxu0 0.0
      %915 = vmatpush.msra.mxu0 0.0
      %916 = vmatpush.msra.mxu0 0.0
      %917 = vmatpush.msra.mxu0 0.0
      %918 = vmatpush.msra.mxu0 0.0
      %919 = vmatpush.msra.mxu0 0.0
      %920 = vmatpush.msra.mxu0 0.0
      %921 = vmatpush.msra.mxu0 0.0
      %922 = vmatpush.msra.mxu0 0.0
      %923 = vmatpush.msra.mxu0 0.0
      %924 = vmatpush.msra.mxu0 %v703
      %925 = vmatmul.f32.gmra.mxu0 %v907
      %v926 = vpop.f32.mrf.mxu0
      %v927 = vadd.f32 0.0, %v926
      %928 = vdwg.mxu0
      %v930 = vsel %vm765, %v889, 0
      %932 = vmatpush.msra.mxu0 0.0
      %933 = vmatpush.msra.mxu0 0.0
      %934 = vmatpush.msra.mxu0 0.0
      %935 = vmatpush.msra.mxu0 0.0
      %936 = vmatpush.msra.mxu0 0.0
      %937 = vmatpush.msra.mxu0 0.0
      %938 = vmatpush.msra.mxu0 0.0
      %939 = vmatpush.msra.mxu0 0.0
      %940 = vmatpush.msra.mxu0 0.0
      %941 = vmatpush.msra.mxu0 0.0
      %942 = vmatpush.msra.mxu0 0.0
      %943 = vmatpush.msra.mxu0 0.0
      %944 = vmatpush.msra.mxu0 0.0
      %945 = vmatpush.msra.mxu0 0.0
      %946 = vmatpush.msra.mxu0 0.0
      %947 = vmatpush.msra.mxu0 %v723
      %948 = vmatmul.f32.gmra.mxu0 %v930
      %v949 = vpop.f32.mrf.mxu0
      %v950 = vadd.f32 0.0, %v949
      %951 = vdwg.mxu0
      %v953 = vsel %vm765, %v891, 0
      %955 = vmatpush.msra.mxu0 0.0
      %956 = vmatpush.msra.mxu0 0.0
      %957 = vmatpush.msra.mxu0 0.0
      %958 = vmatpush.msra.mxu0 0.0
      %959 = vmatpush.msra.mxu0 0.0
      %960 = vmatpush.msra.mxu0 0.0
      %961 = vmatpush.msra.mxu0 0.0
      %962 = vmatpush.msra.mxu0 0.0
      %963 = vmatpush.msra.mxu0 0.0
      %964 = vmatpush.msra.mxu0 0.0
      %965 = vmatpush.msra.mxu0 0.0
      %966 = vmatpush.msra.mxu0 0.0
      %967 = vmatpush.msra.mxu0 0.0
      %968 = vmatpush.msra.mxu0 0.0
      %969 = vmatpush.msra.mxu0 0.0
      %970 = vmatpush.msra.mxu0 %v743
      %971 = vmatmul.f32.gmra.mxu0 %v953
      %v972 = vpop.f32.mrf.mxu0
      %v973 = vadd.f32 0.0, %v972
      %974 = vdwg.mxu0
      %v976 = vsel %vm765, %v893, 0
      %978 = vmatpush.msra.mxu0 0.0
      %979 = vmatpush.msra.mxu0 0.0
      %980 = vmatpush.msra.mxu0 0.0
      %981 = vmatpush.msra.mxu0 0.0
      %982 = vmatpush.msra.mxu0 0.0
      %983 = vmatpush.msra.mxu0 0.0
      %984 = vmatpush.msra.mxu0 0.0
      %985 = vmatpush.msra.mxu0 0.0
      %986 = vmatpush.msra.mxu0 0.0
      %987 = vmatpush.msra.mxu0 0.0
      %988 = vmatpush.msra.mxu0 0.0
      %989 = vmatpush.msra.mxu0 0.0
      %990 = vmatpush.msra.mxu0 0.0
      %991 = vmatpush.msra.mxu0 0.0
      %992 = vmatpush.msra.mxu0 0.0
      %993 = vmatpush.msra.mxu0 %v763
      %994 = vmatmul.f32.gmra.mxu0 %v976
      %v995 = vpop.f32.mrf.mxu0
      %v996 = vadd.f32 0.0, %v995
      %997 = vdwg.mxu0
      %v998 = vrcp.pop %v896
      %v999 = vrcp.pop %v899
      %v1000 = vrcp.pop %v902
      %v1001 = vrcp.pop %v905
      %v1002 = vmul.f32 %v927, %v998
      %v1003 = vmul.f32 %v950, %v999
      %v1004 = vmul.f32 %v973, %v1000
      %v1005 = vmul.f32 %v996, %v1001
      %v1006 = vld [vmem:[%s9] sm:$0xff]
      %v1007 = vld [vmem:[%s9 + $0x8] sm:$0xff]
      %v1008 = vld [vmem:[%s9 + $0x10] sm:$0xff]
      %v1009 = vld [vmem:[%s9 + $0x18] sm:$0xff]
      %v1011 = vsel %vm765, %v1002, 0
      %1013 = vmatpush.msra.mxu0 0.0
      %1014 = vmatpush.msra.mxu0 0.0
      %1015 = vmatpush.msra.mxu0 0.0
      %1016 = vmatpush.msra.mxu0 0.0
      %1017 = vmatpush.msra.mxu0 0.0
      %1018 = vmatpush.msra.mxu0 0.0
      %1019 = vmatpush.msra.mxu0 0.0
      %1020 = vmatpush.msra.mxu0 0.0
      %1021 = vmatpush.msra.mxu0 0.0
      %1022 = vmatpush.msra.mxu0 0.0
      %1023 = vmatpush.msra.mxu0 0.0
      %1024 = vmatpush.msra.mxu0 0.0
      %1025 = vmatpush.msra.mxu0 0.0
      %1026 = vmatpush.msra.mxu0 0.0
      %1027 = vmatpush.msra.mxu0 0.0
      %1028 = vmatpush.msra.mxu0 %v1006
      %1029 = vmatmul.f32.gmra.mxu0 %v1011
      %v1030 = vpop.f32.mrf.mxu0
      %v1031 = vadd.f32 0.0, %v1030
      %1032 = vdwg.mxu0
      %v1034 = vsel %vm765, %v1003, 0
      %1036 = vmatpush.msra.mxu0 0.0
      %1037 = vmatpush.msra.mxu0 0.0
      %1038 = vmatpush.msra.mxu0 0.0
      %1039 = vmatpush.msra.mxu0 0.0
      %1040 = vmatpush.msra.mxu0 0.0
      %1041 = vmatpush.msra.mxu0 0.0
      %1042 = vmatpush.msra.mxu0 0.0
      %1043 = vmatpush.msra.mxu0 0.0
      %1044 = vmatpush.msra.mxu0 0.0
      %1045 = vmatpush.msra.mxu0 0.0
      %1046 = vmatpush.msra.mxu0 0.0
      %1047 = vmatpush.msra.mxu0 0.0
      %1048 = vmatpush.msra.mxu0 0.0
      %1049 = vmatpush.msra.mxu0 0.0
      %1050 = vmatpush.msra.mxu0 0.0
      %1051 = vmatpush.msra.mxu0 %v1007
      %1052 = vmatmul.f32.gmra.mxu0 %v1034
      %v1053 = vpop.f32.mrf.mxu0
      %v1054 = vadd.f32 0.0, %v1053
      %1055 = vdwg.mxu0
      %v1057 = vsel %vm765, %v1004, 0
      %1059 = vmatpush.msra.mxu0 0.0
      %1060 = vmatpush.msra.mxu0 0.0
      %1061 = vmatpush.msra.mxu0 0.0
      %1062 = vmatpush.msra.mxu0 0.0
      %1063 = vmatpush.msra.mxu0 0.0
      %1064 = vmatpush.msra.mxu0 0.0
      %1065 = vmatpush.msra.mxu0 0.0
      %1066 = vmatpush.msra.mxu0 0.0
      %1067 = vmatpush.msra.mxu0 0.0
      %1068 = vmatpush.msra.mxu0 0.0
      %1069 = vmatpush.msra.mxu0 0.0
      %1070 = vmatpush.msra.mxu0 0.0
      %1071 = vmatpush.msra.mxu0 0.0
      %1072 = vmatpush.msra.mxu0 0.0
      %1073 = vmatpush.msra.mxu0 0.0
      %1074 = vmatpush.msra.mxu0 %v1008
      %1075 = vmatmul.f32.gmra.mxu0 %v1057
      %v1076 = vpop.f32.mrf.mxu0
      %v1077 = vadd.f32 0.0, %v1076
      %1078 = vdwg.mxu0
      %v1080 = vsel %vm765, %v1005, 0
      %1082 = vmatpush.msra.mxu0 0.0
      %1083 = vmatpush.msra.mxu0 0.0
      %1084 = vmatpush.msra.mxu0 0.0
      %1085 = vmatpush.msra.mxu0 0.0
      %1086 = vmatpush.msra.mxu0 0.0
      %1087 = vmatpush.msra.mxu0 0.0
      %1088 = vmatpush.msra.mxu0 0.0
      %1089 = vmatpush.msra.mxu0 0.0
      %1090 = vmatpush.msra.mxu0 0.0
      %1091 = vmatpush.msra.mxu0 0.0
      %1092 = vmatpush.msra.mxu0 0.0
      %1093 = vmatpush.msra.mxu0 0.0
      %1094 = vmatpush.msra.mxu0 0.0
      %1095 = vmatpush.msra.mxu0 0.0
      %1096 = vmatpush.msra.mxu0 0.0
      %1097 = vmatpush.msra.mxu0 %v1009
      %1098 = vmatmul.f32.gmra.mxu0 %v1080
      %v1099 = vpop.f32.mrf.mxu0
      %v1100 = vadd.f32 0.0, %v1099
      %1101 = vdwg.mxu0
      %v1102 = vsel %vm451, %v1031, 0.0
      %v1103 = vsel %vm451, %v1054, 0.0
      %v1104 = vadd.f32 %v1102, %v1103
      %v1105 = vsel %vm451, %v1077, 0.0
      %v1106 = vadd.f32 %v1104, %v1105
      %v1107 = vsel %vm451, %v1100, 0.0
      %v1108 = vadd.f32 %v1106, %v1107
      %v1109 = vld [vmem:[%s10] sm:$0x1]
      %v1111 = vperm.slane %v1109, 0
      %v1113 = vadd.f32 %v1108, %v1111
      %1114 = vst.msk [vmem:[%s415] sm:$0xff] %vm451, %v1113
      %p1115 = scmp.lt.s32.totalorder %s22, 1
      %s1116 = scalar_select %p1115, %s22, 1
      %s1117 = smul.addr %s1116, 8
      %s1118 = scalar_lea.vmem %s11, %s1117
      // Predicated region
      $region65: #{_mhsa_forward.1} parent=63 // pred_check
        %p1119 = pneg %p286
      $region66: #{_mhsa_forward.1} parent=63 // pred_check_branch
        %1121 = sbr.rel (%p1119) target = $region68
      $region67: #{_mhsa_forward.1} parent=63 // pred_region
        _
      $region68: #{_mhsa_forward.1} parent=63 // pred_fallthru
        _
    $region64: #{_mhsa_forward.1} parent=5 // pred_fallthru
      _
    %p1122 = scmp.le.s32.totalorder 2, %s17
    // Predicated region
    $region69: #{_mhsa_forward.1} parent=5 // pred_check
      %p1123 = pneg %p1122
    $region70: #{_mhsa_forward.1} parent=5 // pred_check_branch
      %1125 = sbr.rel (%p1123) target = $region72
    $region71: #{_mhsa_forward.1} parent=5 // pred_region
      %s1126 = ssub.s32 %s17, 2
      // Predicated region
      $region73: #{_mhsa_forward.1} parent=71 // pred_check
        %p1127 = pneg %p292
      $region74: #{_mhsa_forward.1} parent=71 // pred_check_branch
        %1129 = sbr.rel (%p1127) target = $region76
      $region75: #{_mhsa_forward.1} parent=71 // pred_region
        %p1130 = scmp.lt.s32.totalorder %s23, 1
        %s1131 = scalar_select %p1130, %s23, 1
        %s1132 = smul.addr %s1131, 8
        %s1133 = scalar_lea.vmem %s11, %s1132
      $region76: #{_mhsa_forward.1} parent=71 // pred_fallthru
        _
    $region72: #{_mhsa_forward.1} parent=5 // pred_fallthru
      _
  $region6: #{_mhsa_forward.1} parent=0 // loop_footer
    %s21 = sadd.s32 1, %s17
  $region7: #{_mhsa_forward.1} parent=0 // loop_footer_branch
    %16 = sbr.rel target = $region3
  $region8: #{_mhsa_forward.1} parent=0 // loop_exit
    _

</llo_original>
